<compile_context>
chip_gen: v7x
topology: tpu7x:2x2x1
jax: 0.10.0
libtpu: 0.0.40
codegen_flags: <defaults>
</compile_context>

<pallas_src>
import math

import jax
import jax.numpy as jnp
from jax.experimental import pallas as pl
from jax.experimental.pallas import tpu as pltpu


# ----------------------------------------------------------------------------
# Exact GELU (erf-based, matching nn.GELU() default).
# erf via Abramowitz & Stegun 7.1.26 (|abs err| <= 1.5e-7), rewritten as
#   gelu(x) = 0.5*x*(1 + erf(x/sqrt(2)))
#           = relu(x) - 0.5*|x| * poly(t) * exp(-x^2/2),  t = 1/(1 + p'*|x|)
# with p' = p/sqrt(2) folded in.  Not bit-parity with torch's exact erf, but
# well inside the 1e-5 tolerance used below.
# ----------------------------------------------------------------------------
_ERF_A = (0.254829592, -0.284496736, 1.421413741, -1.453152027, 1.061405429)
_ERF_P_OVER_SQRT2 = 0.3275911 / math.sqrt(2.0)


def _gelu_exact(x):
    a1, a2, a3, a4, a5 = _ERF_A
    ax = jnp.abs(x)
    d = 1.0 + _ERF_P_OVER_SQRT2 * ax
    t = pl.reciprocal(d, approx=True)          # EUP slot
    t = t * (2.0 - d * t)                      # one Newton step: rel err ~1e-8
    poly = ((((a5 * t + a4) * t + a3) * t + a2) * t + a1) * t
    tail = (0.5 * ax) * poly * jnp.exp(-0.5 * x * x)
    return jnp.maximum(x, 0.0) - tail


# ----------------------------------------------------------------------------
# Kernels
# ----------------------------------------------------------------------------
def _mlp_kernel_single(x_ref, w1_ref, b1_ref, w2_ref, b2_ref, o_ref):
    """th == hid: weights resident, no accumulator scratch, direct writeback."""
    h = jnp.dot(x_ref[...], w1_ref[...], preferred_element_type=jnp.float32)
    h = _gelu_exact(h + b1_ref[...].astype(jnp.float32))
    # TODO(synk): nn.Dropout(p=0.0) is the identity in both train/eval; omitted.
    y = jnp.dot(h.astype(w2_ref.dtype), w2_ref[...],
                preferred_element_type=jnp.float32)
    o_ref[...] = (y + b2_ref[...].astype(jnp.float32)).astype(o_ref.dtype)


def _mlp_kernel_ktiled(x_ref, w1_ref, b1_ref, w2_ref, b2_ref, o_ref, acc_ref):
    """Hidden axis streamed in chunks of th; f32 accumulator seeded with b2."""
    k = pl.program_id(1)

    @pl.when(k == 0)
    def _init():
        acc_ref[...] = jnp.broadcast_to(
            b2_ref[...].astype(jnp.float32), acc_ref.shape)

    h = jnp.dot(x_ref[...], w1_ref[...], preferred_element_type=jnp.float32)
    h = _gelu_exact(h + b1_ref[...].astype(jnp.float32))   # b1 per hidden chunk
    # TODO(synk): nn.Dropout(p=0.0) is the identity in both train/eval; omitted.
    acc_ref[...] += jnp.dot(h.astype(w2_ref.dtype), w2_ref[...],
                            preferred_element_type=jnp.float32)

    @pl.when(k == pl.num_programs(1) - 1)
    def _finalize():
        o_ref[...] = acc_ref[...].astype(o_ref.dtype)


# ----------------------------------------------------------------------------
# Tiling / VMEM helpers
# ----------------------------------------------------------------------------
def _round_up(x, m):
    return ((x + m - 1) // m) * m


def _sublane(itemsize):
    # (8, 128) tiling: 8 rows for 4-byte dtypes, 16 for bf16, 32 for 1-byte.
    return 8 * max(1, 4 // itemsize)


def _vmem_caps():
    # v7x has 64 MiB of VMEM per TensorCore (v5e/v6e: 128 MiB).  get_tpu_info()
    # may report an aggregate / per-chip figure on multi-TC parts, so clamp to
    # the 64 MiB per-TC floor; 0.7 leaves headroom for pipeline buffers and
    # compiler-internal scratch.
    cap = 64 * 1024 * 1024
    try:
        reported = int(getattr(pltpu.get_tpu_info(), "vmem_capacity_bytes", 0) or 0)
        if 0 < reported < cap:
            cap = reported
    except Exception:
        pass
    return cap, int(0.7 * cap)


def _mlp_vmem_bytes(tm, in_f, th, out_p, itemsize, *, multi_k):
    # Activations / output: double-buffered by the pipeline.
    x_t = 2 * tm * in_f * itemsize
    out_t = 2 * tm * out_p * itemsize
    # Weights / biases: counted double-buffered (conservative).  With constant
    # block indices they are DMA'd only once, but buffers may still be allocated.
    w_t = 2 * (in_f * th + th * out_p + th + out_p) * itemsize
    # f32 accumulator scratch only in the streamed (k-tiled) regime.
    acc = tm * out_p * 4 if multi_k else 0
    # h (f32), GELU temporaries, and the cast copy are distinct VMEM
    # materializations: ~3 f32 copies of (tm, th) + one native-dtype copy.
    interm = 3 * tm * th * 4 + tm * th * itemsize
    return x_t + out_t + w_t + acc + interm


def _pick_hidden_tile(in_f, hid, out_p, itemsize, budget):
    # Lane-aligned divisors of hid (no zero-padding of the hidden dim), largest
    # first; fall back to 256 (hidden gets zero-padded, gelu(0)=0 contributes 0).
    cands = [d for d in range(hid - 128, 127, -128) if hid % d == 0]
    cands = cands or [256]
    tm_min = _sublane(itemsize)
    for th in cands:
        if _mlp_vmem_bytes(tm_min, in_f, th, out_p, itemsize, multi_k=True) <= budget:
            return th
    return cands[-1]


def _choose_row_tile(n_tok, in_f, th, out_p, itemsize, budget, *, multi_k):
    sub = _sublane(itemsize)
    # Streaming regime: bigger row tiles keep per-k arithmetic intensity
    # (~2*tm/itemsize flop/byte) above the weight-HBM roofline.  Resident
    # regime: 512 is plenty for MXU fill and pipelining.
    cap = 1024 if multi_k else 512
    tm = min(_round_up(n_tok, sub), cap)
    # Megacore (v7x): make the row-tile count >= 2 and even when there is
    # enough work; single-TC chips with small N_tok keep one full tile
    # (better MXU LHS fill, no per-step grid overhead).
    if n_tok >= 256:
        tiles = pl.cdiv(n_tok, tm)
        if tiles < 2:
            tm = _round_up(pl.cdiv(n_tok, 2), sub)
        elif tiles % 2 == 1:
            tm = _round_up(pl.cdiv(n_tok, tiles + 1), sub)
    # Shrink tm (never th) until the working set fits the budget.
    while tm > sub and _mlp_vmem_bytes(tm, in_f, th, out_p, itemsize,
                                       multi_k=multi_k) > budget:
        tm = max(sub, _round_up(tm // 2, sub))
    return tm


# ----------------------------------------------------------------------------
# One-time parameter preparation (hoists all weight padding out of forward).
# ----------------------------------------------------------------------------
def prepare_mlp_params(w1, b1, w2, b2, *, hidden_tile=None):
    """w1:(in,hid), w2:(hid,out) pre-transposed; biases (hid,)/(out,) or (1,·)."""
    b1 = b1.reshape(1, -1)
    b2 = b2.reshape(1, -1)
    in_f, hid = w1.shape
    out_f = w2.shape[1]
    itemsize = jnp.dtype(w1.dtype).itemsize
    vmem_cap, budget = _vmem_caps()

    # Lane-dense output (unmasked vst): pad OUT up to a multiple of 128.
    out_p = _round_up(out_f, 128)
    if out_p != out_f:
        w2 = jnp.pad(w2, ((0, 0), (0, out_p - out_f)))
        b2 = jnp.pad(b2, ((0, 0), (0, out_p - out_f)))

    # Prefer th == hid (weights fetched from HBM exactly once for the whole
    # grid); only stream the hidden axis when the resident working set does not
    # fit the budget even at the minimum row tile.
    th = hid
    if hidden_tile is not None:
        th = max(128, _round_up(min(hidden_tile, hid), 128))
    elif _mlp_vmem_bytes(_sublane(itemsize), in_f, hid, out_p, itemsize,
                         multi_k=False) > budget:
        th = _pick_hidden_tile(in_f, hid, out_p, itemsize, budget)

    if th < hid:
        hid_p = _round_up(hid, th)
        if hid_p != hid:
            pad = hid_p - hid
            # Padded hidden columns: x@0 + 0 = 0, gelu(0) = 0, times zero rows
            # of w2 -> contribute exactly 0.
            w1 = jnp.pad(w1, ((0, 0), (0, pad)))
            b1 = jnp.pad(b1, ((0, 0), (0, pad)))
            w2 = jnp.pad(w2, ((0, pad), (0, 0)))
    else:
        th = hid
        hid_p = hid

    return dict(w1=w1, b1=b1, w2=w2, b2=b2, in_f=in_f, hid_p=hid_p, th=th,
                out_f=out_f, out_p=out_p, budget=budget, vmem_cap=vmem_cap)


# ----------------------------------------------------------------------------
# Forward wrapper
# ----------------------------------------------------------------------------
def mlp_forward(x, params, *, tm=None):
    in_f, hid_p, th = params["in_f"], params["hid_p"], params["th"]
    out_f, out_p = params["out_f"], params["out_p"]
    budget, vmem_cap = params["budget"], params["vmem_cap"]
    assert x.shape[-1] == in_f, (x.shape, in_f)

    lead = x.shape[:-1]
    x2 = x.reshape(-1, in_f)
    n_tok = x2.shape[0]
    itemsize = jnp.dtype(x.dtype).itemsize
    sub = _sublane(itemsize)
    n_k = hid_p // th

    tm_sel = tm if tm is not None else _choose_row_tile(
        n_tok, in_f, th, out_p, itemsize, budget, multi_k=(n_k > 1))
    tm_sel = max(sub, _round_up(tm_sel, sub))
    tm_sel = min(tm_sel, _round_up(n_tok, sub))

    n_pad = _round_up(n_tok, tm_sel)
    if n_pad != n_tok:
        x2 = jnp.pad(x2, ((0, n_pad - n_tok), (0, 0)))

    if n_k == 1:
        kernel = _mlp_kernel_single
        grid_spec = pltpu.PrefetchScalarGridSpec(
            num_scalar_prefetch=0,
            grid=(n_pad // tm_sel,),
            in_specs=[
                pl.BlockSpec((tm_sel, in_f), lambda i: (i, 0)),
                pl.BlockSpec((in_f, hid_p), lambda i: (0, 0)),   # resident
                pl.BlockSpec((1, hid_p), lambda i: (0, 0)),
                pl.BlockSpec((hid_p, out_p), lambda i: (0, 0)),  # resident
                pl.BlockSpec((1, out_p), lambda i: (0, 0)),
            ],
            out_specs=pl.BlockSpec((tm_sel, out_p), lambda i: (i, 0)),
        )
        dims = ("parallel",)
    else:
        kernel = _mlp_kernel_ktiled
        grid_spec = pltpu.PrefetchScalarGridSpec(
            num_scalar_prefetch=0,
            grid=(n_pad // tm_sel, n_k),
            in_specs=[
                pl.BlockSpec((tm_sel, in_f), lambda i, k: (i, 0)),
                pl.BlockSpec((in_f, th), lambda i, k: (0, k)),
                pl.BlockSpec((1, th), lambda i, k: (0, k)),
                pl.BlockSpec((th, out_p), lambda i, k: (k, 0)),
                pl.BlockSpec((1, out_p), lambda i, k: (0, 0)),
            ],
            out_specs=pl.BlockSpec((tm_sel, out_p), lambda i, k: (i, 0)),
            scratch_shapes=[pltpu.VMEM((tm_sel, out_p), jnp.float32)],
        )
        dims = ("parallel", "arbitrary")

    out = pl.pallas_call(
        kernel,
        out_shape=jax.ShapeDtypeStruct((n_pad, out_p), x.dtype),
        grid_spec=grid_spec,
        compiler_params=pltpu.CompilerParams(
            dimension_semantics=dims,
            vmem_limit_bytes=vmem_cap,
        ),
    )(x2, params["w1"], params["b1"], params["w2"], params["b2"])

    if n_pad != n_tok or out_p != out_f:
        out = out[:n_tok, :out_f]
    return out.reshape(*lead, out_f)


# ----------------------------------------------------------------------------
# Deterministic parameter init (mimics nn.Linear default: U(-1/sqrt(in), 1/sqrt(in)))
# ----------------------------------------------------------------------------
def init_mlp_params(key, in_features, hidden_features, out_features, dtype=jnp.float32):
    k1, k2, k3, k4 = jax.random.split(key, 4)
    bnd1 = 1.0 / math.sqrt(in_features)
    bnd2 = 1.0 / math.sqrt(hidden_features)
    # Stored pre-transposed as (in, out): x @ W + b == PyTorch x @ W.T + b.
    w1 = jax.random.uniform(k1, (in_features, hidden_features), dtype, -bnd1, bnd1)
    b1 = jax.random.uniform(k2, (1, hidden_features), dtype, -bnd1, bnd1)
    w2 = jax.random.uniform(k3, (hidden_features, out_features), dtype, -bnd2, bnd2)
    b2 = jax.random.uniform(k4, (1, out_features), dtype, -bnd2, bnd2)
    return w1, b1, w2, b2


if __name__ == "__main__":
    key = jax.random.PRNGKey(0)
    kx, kp, kx2, kp2 = jax.random.split(key, 4)

    # Case 1: small shapes — batch=2, seq=8, in=32, hidden=64, out=32.
    # Exercises the resident-weight fast path (single hidden step, no scratch)
    # and the lane-dense OUT padding (32 -> 128).
    B, S, IN, HID, OUT = 2, 8, 32, 64, 32
    x = jax.random.normal(kx, (B, S, IN), dtype=jnp.float32)
    w1, b1, w2, b2 = init_mlp_params(kp, IN, HID, OUT)
    params = prepare_mlp_params(w1, b1, w2, b2)      # one-time padding
    y = jax.block_until_ready(mlp_forward(x, params))
    assert y.shape == (B, S, OUT), y.shape
    h_ref = jax.nn.gelu(x.reshape(-1, IN) @ w1 + b1, approximate=False)
    y_ref = (h_ref @ w2 + b2).reshape(B, S, OUT)
    assert jnp.allclose(y, y_ref, atol=1e-5, rtol=1e-5), \
        float(jnp.max(jnp.abs(y - y_ref)))

    # Case 2: force hidden-axis streaming (k-tiled grid, b2-seeded f32 accumulator).
    HID2 = 512
    x2 = jax.random.normal(kx2, (B, S, IN), dtype=jnp.float32)
    w1b, b1b, w2b, b2b = init_mlp_params(kp2, IN, HID2, OUT)
    params2 = prepare_mlp_params(w1b, b1b, w2b, b2b, hidden_tile=256)
    y2 = jax.block_until_ready(mlp_forward(x2, params2))
    assert y2.shape == (B, S, OUT), y2.shape
    h2_ref = jax.nn.gelu(x2.reshape(-1, IN) @ w1b + b1b, approximate=False)
    y2_ref = (h2_ref @ w2b + b2b).reshape(B, S, OUT)
    assert jnp.allclose(y2, y2_ref, atol=1e-4, rtol=1e-4), \
        float(jnp.max(jnp.abs(y2 - y2_ref)))

    print("KERNEL_OK")
</pallas_src>

<mosaic_0001>
module attributes {stable_mosaic.version = 11 : i64} {
  func.func @_mlp_kernel_single(%arg0: i32, %arg1: memref<16x32xf32, #tpu.memory_space<vmem>>, %arg2: memref<32x64xf32, #tpu.memory_space<vmem>>, %arg3: memref<1x64xf32, #tpu.memory_space<vmem>>, %arg4: memref<64x128xf32, #tpu.memory_space<vmem>>, %arg5: memref<1x128xf32, #tpu.memory_space<vmem>>, %arg6: memref<16x128xf32, #tpu.memory_space<vmem>>) attributes {dimension_semantics = [#tpu.dimension_semantics<parallel>], iteration_bounds = array<i64: 1>, scalar_prefetch = 0 : i64, scratch_operands = 0 : i64, tpu.core_type = #tpu.core_type<tc>, window_params = [{transform_indices = @transform_0, window_bounds = array<i64: 16, 32>}, {pipeline_mode = #tpu.pipeline_mode<synchronous>, transform_indices = @transform_1, window_bounds = array<i64: 32, 64>}, {pipeline_mode = #tpu.pipeline_mode<synchronous>, transform_indices = @transform_2, window_bounds = array<i64: 1, 64>}, {pipeline_mode = #tpu.pipeline_mode<synchronous>, transform_indices = @transform_3, window_bounds = array<i64: 64, 128>}, {pipeline_mode = #tpu.pipeline_mode<synchronous>, transform_indices = @transform_4, window_bounds = array<i64: 1, 128>}, {transform_indices = @transform_5, window_bounds = array<i64: 16, 128>}]} {
    %c0 = arith.constant 0 : index
    %c0_0 = arith.constant 0 : index
    %0 = vector.load %arg1[%c0, %c0_0] : memref<16x32xf32, #tpu.memory_space<vmem>>, vector<16x32xf32>
    %c0_1 = arith.constant 0 : index
    %c0_2 = arith.constant 0 : index
    %1 = vector.load %arg2[%c0_1, %c0_2] : memref<32x64xf32, #tpu.memory_space<vmem>>, vector<32x64xf32>
    %cst = arith.constant dense<0.000000e+00> : vector<16x64xf32>
    %2 = tpu.matmul %0, %1, %cst {dimension_numbers = #tpu.dot_dimension_numbers<[1], [0], [0], [1], [0, 0, 1, 1], [], []>} : vector<16x32xf32>, vector<32x64xf32>, vector<16x64xf32> -> vector<16x64xf32>
    %c0_3 = arith.constant 0 : index
    %c0_4 = arith.constant 0 : index
    %3 = vector.load %arg3[%c0_3, %c0_4] : memref<1x64xf32, #tpu.memory_space<vmem>>, vector<1x64xf32>
    %4 = vector.broadcast %3 : vector<1x64xf32> to vector<16x64xf32>
    %5 = arith.addf %2, %4 : vector<16x64xf32>
    %6 = math.absf %5 : vector<16x64xf32>
    %cst_5 = arith.constant 0.231641889 : f32
    %7 = vector.broadcast %cst_5 : f32 to vector<16x64xf32>
    %8 = arith.mulf %7, %6 : vector<16x64xf32>
    %cst_6 = arith.constant 1.000000e+00 : f32
    %9 = vector.broadcast %cst_6 : f32 to vector<16x64xf32>
    %10 = arith.addf %9, %8 : vector<16x64xf32>
    %11 = tpu.reciprocal %10 {approx = true} : vector<16x64xf32> -> vector<16x64xf32>
    %12 = arith.mulf %10, %11 : vector<16x64xf32>
    %cst_7 = arith.constant 2.000000e+00 : f32
    %13 = vector.broadcast %cst_7 : f32 to vector<16x64xf32>
    %14 = arith.subf %13, %12 : vector<16x64xf32>
    %15 = arith.mulf %11, %14 : vector<16x64xf32>
    %cst_8 = arith.constant 1.06140542 : f32
    %16 = vector.broadcast %cst_8 : f32 to vector<16x64xf32>
    %17 = arith.mulf %16, %15 : vector<16x64xf32>
    %cst_9 = arith.constant -1.45315206 : f32
    %18 = vector.broadcast %cst_9 : f32 to vector<16x64xf32>
    %19 = arith.addf %17, %18 : vector<16x64xf32>
    %20 = arith.mulf %19, %15 : vector<16x64xf32>
    %cst_10 = arith.constant 1.42141378 : f32
    %21 = vector.broadcast %cst_10 : f32 to vector<16x64xf32>
    %22 = arith.addf %20, %21 : vector<16x64xf32>
    %23 = arith.mulf %22, %15 : vector<16x64xf32>
    %cst_11 = arith.constant -0.284496725 : f32
    %24 = vector.broadcast %cst_11 : f32 to vector<16x64xf32>
    %25 = arith.addf %23, %24 : vector<16x64xf32>
    %26 = arith.mulf %25, %15 : vector<16x64xf32>
    %cst_12 = arith.constant 0.254829586 : f32
    %27 = vector.broadcast %cst_12 : f32 to vector<16x64xf32>
    %28 = arith.addf %26, %27 : vector<16x64xf32>
    %29 = arith.mulf %28, %15 : vector<16x64xf32>
    %cst_13 = arith.constant 5.000000e-01 : f32
    %30 = vector.broadcast %cst_13 : f32 to vector<16x64xf32>
    %31 = arith.mulf %30, %6 : vector<16x64xf32>
    %32 = arith.mulf %31, %29 : vector<16x64xf32>
    %cst_14 = arith.constant -5.000000e-01 : f32
    %33 = vector.broadcast %cst_14 : f32 to vector<16x64xf32>
    %34 = arith.mulf %33, %5 : vector<16x64xf32>
    %35 = arith.mulf %34, %5 : vector<16x64xf32>
    %36 = math.exp %35 : vector<16x64xf32>
    %37 = arith.mulf %32, %36 : vector<16x64xf32>
    %cst_15 = arith.constant 0.000000e+00 : f32
    %38 = vector.broadcast %cst_15 : f32 to vector<16x64xf32>
    %39 = arith.maximumf %5, %38 : vector<16x64xf32>
    %40 = arith.subf %39, %37 : vector<16x64xf32>
    %c0_16 = arith.constant 0 : index
    %c0_17 = arith.constant 0 : index
    %41 = vector.load %arg4[%c0_16, %c0_17] : memref<64x128xf32, #tpu.memory_space<vmem>>, vector<64x128xf32>
    %cst_18 = arith.constant dense<0.000000e+00> : vector<16x128xf32>
    %42 = tpu.matmul %40, %41, %cst_18 {dimension_numbers = #tpu.dot_dimension_numbers<[1], [0], [0], [1], [0, 0, 1, 1], [], []>} : vector<16x64xf32>, vector<64x128xf32>, vector<16x128xf32> -> vector<16x128xf32>
    %c0_19 = arith.constant 0 : index
    %c0_20 = arith.constant 0 : index
    %43 = vector.load %arg5[%c0_19, %c0_20] : memref<1x128xf32, #tpu.memory_space<vmem>>, vector<1x128xf32>
    %44 = vector.broadcast %43 : vector<1x128xf32> to vector<16x128xf32>
    %45 = arith.addf %42, %44 : vector<16x128xf32>
    %c0_21 = arith.constant 0 : index
    %c0_22 = arith.constant 0 : index
    %46 = vector.load %arg6[%c0_21, %c0_22] : memref<16x128xf32, #tpu.memory_space<vmem>>, vector<16x128xf32>
    tpu.vector_store %arg6[%c0_21, %c0_22], %45 {strides = array<i32>} : memref<16x128xf32, #tpu.memory_space<vmem>>, vector<16x128xf32>,
    return
  }
  func.func @transform_0(%arg0: i32) -> (i32, i32) {
    %c0_i32 = arith.constant 0 : i32
    %c0_i32_0 = arith.constant 0 : i32
    return %arg0, %c0_i32 : i32, i32
  }
  func.func @transform_1(%arg0: i32) -> (i32, i32) {
    %c0_i32 = arith.constant 0 : i32
    %c0_i32_0 = arith.constant 0 : i32
    %c0_i32_1 = arith.constant 0 : i32
    return %c0_i32, %c0_i32_0 : i32, i32
  }
  func.func @transform_2(%arg0: i32) -> (i32, i32) {
    %c0_i32 = arith.constant 0 : i32
    %c0_i32_0 = arith.constant 0 : i32
    %c0_i32_1 = arith.constant 0 : i32
    return %c0_i32, %c0_i32_0 : i32, i32
  }
  func.func @transform_3(%arg0: i32) -> (i32, i32) {
    %c0_i32 = arith.constant 0 : i32
    %c0_i32_0 = arith.constant 0 : i32
    %c0_i32_1 = arith.constant 0 : i32
    return %c0_i32, %c0_i32_0 : i32, i32
  }
  func.func @transform_4(%arg0: i32) -> (i32, i32) {
    %c0_i32 = arith.constant 0 : i32
    %c0_i32_0 = arith.constant 0 : i32
    %c0_i32_1 = arith.constant 0 : i32
    return %c0_i32, %c0_i32_0 : i32, i32
  }
  func.func @transform_5(%arg0: i32) -> (i32, i32) {
    %c0_i32 = arith.constant 0 : i32
    %c0_i32_0 = arith.constant 0 : i32
    return %arg0, %c0_i32 : i32, i32
  }
}

</mosaic_0001>

<llo_original>
// kernel: tpu_custom_call.1
$region0: #{tpu_custom_call.1}
  #allocation0 [shape = 'u32[]', space=smem, size = 0x4, offset = 0x4, fixed_abs, tag = 'smem constant byte address 0x4 - core index']
  #allocation1 [shape = 'u32[144,128]{1,0:T(1,128)}', space=vmem, size = 0x12000, scoped, tag = 'internal scratch']
  %s0 = inlined_call_operand.hbm [shape: f32[16,32], index: 0, kind: input, shape index: {}]
  %s1 = inlined_call_operand.hbm [shape: f32[32,64], index: 1, kind: input, shape index: {}]
  %s2 = inlined_call_operand.hbm [shape: f32[1,64], index: 2, kind: input, shape index: {}]
  %s3 = inlined_call_operand.hbm [shape: f32[64,128], index: 3, kind: input, shape index: {}]
  %s4 = inlined_call_operand.hbm [shape: f32[1,128], index: 4, kind: input, shape index: {}]
  %s5 = inlined_call_operand.hbm [shape: f32[16,128], index: 5, kind: output, shape index: {}]
  %s6 = sld [smem:[#allocation0]]
  $region50: #{tpu_custom_call.1} parent=0
    _
  %s8 = ssub.s32 1, %s6
  %s9 = scalar_select 0, %s8, %s6
  $region1: #{tpu_custom_call.1} parent=0
    #allocation2 [shape = 'u8[8192]{0}', space=vmem, size = 0x2000, scoped, tag = 'input window, operand 0, single buffered']
    #allocation3 [shape = 's32[1]{0}', space=sflag, size = 0x4, scoped, tag = 'scoped memory for tpu_custom_call.1']
    #allocation4 [shape = 's32[1]{0}', space=sflag, size = 0x4, scoped, tag = 'scoped memory for tpu_custom_call.1']
    #allocation5 [shape = 'u8[16384]{0}', space=vmem, size = 0x4000, scoped, tag = 'input window, operand 1, single buffered']
    #allocation6 [shape = 's32[1]{0}', space=sflag, size = 0x4, scoped, tag = 'scoped memory for tpu_custom_call.1']
    #allocation7 [shape = 'u8[512]{0}', space=vmem, size = 0x400, scoped, tag = 'input window, operand 2, single buffered']
    #allocation8 [shape = 'u8[32768]{0}', space=vmem, size = 0x8000, scoped, tag = 'input window, operand 3, single buffered']
    #allocation9 [shape = 's32[1]{0}', space=sflag, size = 0x4, scoped, tag = 'scoped memory for tpu_custom_call.1']
    #allocation10 [shape = 'u8[512]{0}', space=vmem, size = 0x400, scoped, tag = 'input window, operand 4, single buffered']
    #allocation11 [shape = 'u8[8192]{0}', space=vmem, size = 0x2000, scoped, tag = 'output window, operand 0, single buffered']
    %10 = vsyncpa [#allocation3], 0
    %11 = vsyncpa [#allocation6], 0
    %12 = vsyncpa [#allocation9], 0
    %13 = vsyncpa [#allocation4], 0
    // Predicated region
    $region2: #{tpu_custom_call.1} parent=1 // pred_check
      _
    $region3: #{tpu_custom_call.1} parent=1 // pred_check_branch
      %15 = sbr.rel (0) target = $region5
    $region4: #{tpu_custom_call.1} parent=1 // pred_region
      %s17 = ssub.s32 256, 256
      %18 = vsyncadd [#allocation3], %s17
      %s19 = sshll.u32 [#allocation2], 4
      %s20 = int_to_ptr.vmem [resolvable:$true] %s19
      %25 = dma.hbm_to_vmem [thread:$0]  %s0, 256, %s20, [#allocation3], 128, 128, 8
    $region5: #{tpu_custom_call.1} parent=1 // pred_fallthru
      _
    // Predicated region
    $region6: #{tpu_custom_call.1} parent=1 // pred_check
      _
    $region7: #{tpu_custom_call.1} parent=1 // pred_check_branch
      %27 = sbr.rel (0) target = $region9
    $region8: #{tpu_custom_call.1} parent=1 // pred_region
      %s29 = ssub.s32 512, 512
      %30 = vsyncadd [#allocation6], %s29
      %s31 = sshll.u32 [#allocation5], 4
      %s32 = int_to_ptr.vmem [resolvable:$true] %s31
      %37 = dma.hbm_to_vmem [thread:$0]  %s1, 512, %s32, [#allocation6], 128, 128, 8
    $region9: #{tpu_custom_call.1} parent=1 // pred_fallthru
      _
    // Predicated region
    $region10: #{tpu_custom_call.1} parent=1 // pred_check
      _
    $region11: #{tpu_custom_call.1} parent=1 // pred_check_branch
      %39 = sbr.rel (0) target = $region13
    $region12: #{tpu_custom_call.1} parent=1 // pred_region
      %s41 = ssub.s32 16, 16
      %42 = vsyncadd [#allocation6], %s41
      %s44 = sshll.u32 [#allocation7], 4
      %s45 = int_to_ptr.vmem [resolvable:$true] %s44
      %47 = dma.hbm_to_vmem [thread:$0]  %s2, 16, %s45, [#allocation6]
    $region13: #{tpu_custom_call.1} parent=1 // pred_fallthru
      _
    // Predicated region
    $region14: #{tpu_custom_call.1} parent=1 // pred_check
      _
    $region15: #{tpu_custom_call.1} parent=1 // pred_check_branch
      %49 = sbr.rel (0) target = $region17
    $region16: #{tpu_custom_call.1} parent=1 // pred_region
      %s51 = ssub.s32 1024, 1024
      %52 = vsyncadd [#allocation9], %s51
      %s53 = sshll.u32 [#allocation8], 4
      %s54 = int_to_ptr.vmem [resolvable:$true] %s53
      %59 = dma.hbm_to_vmem [thread:$0]  %s3, 1024, %s54, [#allocation9], 128, 128, 8
    $region17: #{tpu_custom_call.1} parent=1 // pred_fallthru
      _
    // Predicated region
    $region18: #{tpu_custom_call.1} parent=1 // pred_check
      _
    $region19: #{tpu_custom_call.1} parent=1 // pred_check_branch
      %61 = sbr.rel (0) target = $region21
    $region20: #{tpu_custom_call.1} parent=1 // pred_region
      %s63 = ssub.s32 16, 16
      %64 = vsyncadd [#allocation9], %s63
      %s66 = sshll.u32 [#allocation10], 4
      %s67 = int_to_ptr.vmem [resolvable:$true] %s66
      %69 = dma.hbm_to_vmem [thread:$0]  %s4, 16, %s67, [#allocation9]
    $region21: #{tpu_custom_call.1} parent=1 // pred_fallthru
      _
    // Predicated region
    $region22: #{tpu_custom_call.1} parent=1 // pred_check
      _
    $region23: #{tpu_custom_call.1} parent=1 // pred_check_branch
      %71 = sbr.rel (0) target = $region25
    $region24: #{tpu_custom_call.1} parent=1 // pred_region
      %72 = dma.done [#allocation3], 256
    $region25: #{tpu_custom_call.1} parent=1 // pred_fallthru
      _
    // Predicated region
    $region26: #{tpu_custom_call.1} parent=1 // pred_check
      _
    $region27: #{tpu_custom_call.1} parent=1 // pred_check_branch
      %74 = sbr.rel (0) target = $region29
    $region28: #{tpu_custom_call.1} parent=1 // pred_region
      %75 = dma.done [#allocation6], 512
    $region29: #{tpu_custom_call.1} parent=1 // pred_fallthru
      _
    // Predicated region
    $region30: #{tpu_custom_call.1} parent=1 // pred_check
      _
    $region31: #{tpu_custom_call.1} parent=1 // pred_check_branch
      %77 = sbr.rel (0) target = $region33
    $region32: #{tpu_custom_call.1} parent=1 // pred_region
      %78 = dma.done [#allocation6], 16
    $region33: #{tpu_custom_call.1} parent=1 // pred_fallthru
      _
    // Predicated region
    $region34: #{tpu_custom_call.1} parent=1 // pred_check
      _
    $region35: #{tpu_custom_call.1} parent=1 // pred_check_branch
      %80 = sbr.rel (0) target = $region37
    $region36: #{tpu_custom_call.1} parent=1 // pred_region
      %81 = dma.done [#allocation9], 1024
    $region37: #{tpu_custom_call.1} parent=1 // pred_fallthru
      _
    // Predicated region
    $region38: #{tpu_custom_call.1} parent=1 // pred_check
      _
    $region39: #{tpu_custom_call.1} parent=1 // pred_check_branch
      %83 = sbr.rel (0) target = $region41
    $region40: #{tpu_custom_call.1} parent=1 // pred_region
      %84 = dma.done [#allocation9], 16
    $region41: #{tpu_custom_call.1} parent=1 // pred_fallthru
      _
    %v85 = vld [vmem:[#allocation2] sm:$0xff]
    %v86 = vld [vmem:[#allocation2 + $0x8] sm:$0xff]
    %v87 = vld [vmem:[#allocation5] sm:$0xff]
    %v88 = vld [vmem:[#allocation5 + $0x8] sm:$0xff]
    %v89 = vld [vmem:[#allocation5 + $0x10] sm:$0xff]
    %v90 = vld [vmem:[#allocation5 + $0x18] sm:$0xff]
    %v91 = vld [vmem:[#allocation7] sm:$0x1]
    %v93 = vlaneseq
    %v94 = vshrl.u32 %v93, 7
    %v95 = vsub.s32 0, %v94
    %v96 = vrot.slane %v91, %v95
    %vm98 = vcmask 261120
    %v100 = vsel %vm98, %v85, 0
    %v103 = vsel %vm98, %v86, 0
    %105 = vmatprep.subr.mxu0 0.0
    %106 = vmatpush1.msra.mxu0 %v87
    %107 = vmatprep.subr.mxu0 0.0
    %108 = vmatpush1.msra.mxu0 %v88
    %109 = vmatprep.subr.mxu0 0.0
    %110 = vmatpush1.msra.mxu0 %v89
    %111 = vmatprep.subr.mxu0 0.0
    %112 = vmatpush1.msra.mxu0 %v90
    %113 = vmatprep.subr.mxu0 0.0
    %114 = vmatpush1.msra.mxu0 0.0
    %115 = vmatprep.subr.mxu0 0.0
    %116 = vmatpush1.msra.mxu0 0.0
    %117 = vmatprep.subr.mxu0 0.0
    %118 = vmatpush1.msra.mxu0 0.0
    %119 = vmatprep.subr.mxu0 0.0
    %120 = vmatpush1.msra.mxu0 0.0
    %121 = vmatprep.subr.mxu0 0.0
    %122 = vmatpush1.msra.mxu0 0.0
    %123 = vmatprep.subr.mxu0 0.0
    %124 = vmatpush1.msra.mxu0 0.0
    %125 = vmatprep.subr.mxu0 0.0
    %126 = vmatpush1.msra.mxu0 0.0
    %127 = vmatprep.subr.mxu0 0.0
    %128 = vmatpush1.msra.mxu0 0.0
    %129 = vmatprep.subr.mxu0 0.0
    %130 = vmatpush1.msra.mxu0 0.0
    %131 = vmatprep.subr.mxu0 0.0
    %132 = vmatpush1.msra.mxu0 0.0
    %133 = vmatprep.subr.mxu0 0.0
    %134 = vmatpush1.msra.mxu0 0.0
    %135 = vmatprep.subr.mxu0 0.0
    %136 = vmatpush1.msra.mxu0 0.0
    %137 = vmatprep.subr.mxu0 0.0
    %138 = vmatpush1.msra.mxu0 0.0
    %139 = vmatprep.subr.mxu0 0.0
    %140 = vmatpush1.msra.mxu0 0.0
    %141 = vmatprep.subr.mxu0 0.0
    %142 = vmatpush1.msra.mxu0 0.0
    %143 = vmatprep.subr.mxu0 0.0
    %144 = vmatpush1.msra.mxu0 0.0
    %145 = vmatprep.subr.mxu0 0.0
    %146 = vmatpush1.msra.mxu0 0.0
    %147 = vmatprep.subr.mxu0 0.0
    %148 = vmatpush1.msra.mxu0 0.0
    %149 = vmatprep.subr.mxu0 0.0
    %150 = vmatpush1.msra.mxu0 0.0
    %151 = vmatprep.subr.mxu0 0.0
    %152 = vmatpush1.msra.mxu0 0.0
    %153 = vmatprep.subr.mxu0 0.0
    %154 = vmatpush1.msra.mxu0 0.0
    %155 = vmatprep.subr.mxu0 0.0
    %156 = vmatpush1.msra.mxu0 0.0
    %157 = vmatprep.subr.mxu0 0.0
    %158 = vmatpush1.msra.mxu0 0.0
    %159 = vmatprep.subr.mxu0 0.0
    %160 = vmatpush1.msra.mxu0 0.0
    %161 = vmatprep.subr.mxu0 0.0
    %162 = vmatpush1.msra.mxu0 0.0
    %163 = vmatprep.subr.mxu0 0.0
    %164 = vmatpush1.msra.mxu0 0.0
    %165 = vmatprep.subr.mxu0 0.0
    %166 = vmatpush1.msra.mxu0 0.0
    %167 = vmatprep.subr.mxu0 0.0
    %168 = vmatpush1.msra.mxu0 0.0
    %169 = vmatprep.mubr.f32.mxu0 0.0
    %170 = vmatmul.mubr.f32.gmra.mrb[0].mxu0 %v100
    %v171 = vpop.f32.mrb[0].mxu0
    %v172 = vadd.f32 %v96, %v171
    %v173 = vpop.f32.mrb[0].mxu0
    %174 = vmatprep.mubr.f32.mxu0 0.0
    %175 = vmatmul.mubr.f32.gmra.mrb[0].mxu0 %v103
    %v176 = vpop.f32.mrb[0].mxu0
    %v177 = vadd.f32 %v96, %v176
    %v178 = vpop.f32.mrb[0].mxu0
    %179 = vdwg.mxu0
    %v180 = vand.u32 2147483647, %v172
    %v181 = vand.u32 2147483647, %v177
    %v182 = vmul.f32 %v180, 0.23164189
    %v183 = vmul.f32 %v181, 0.23164189
    %v184 = vadd.f32 %v182, 1.0
    %v185 = vadd.f32 %v183, 1.0
    %v186 = vrcp.pop %v184
    %v187 = vrcp.pop %v185
    %v188 = vmul.f32 %v184, %v186
    %v189 = vmul.f32 %v185, %v187
    %v190 = vsub.f32 2.0, %v188
    %v191 = vsub.f32 2.0, %v189
    %v192 = vmul.f32 %v186, %v190
    %v193 = vmul.f32 %v187, %v191
    %v194 = vmul.f32 %v192, 1.0614054
    %v195 = vmul.f32 %v193, 1.0614054
    %v196 = vadd.f32 %v194, -1.4531521
    %v197 = vadd.f32 %v195, -1.4531521
    %v198 = vmul.f32 %v196, %v192
    %v199 = vmul.f32 %v197, %v193
    %v200 = vadd.f32 %v198, 1.4214138
    %v201 = vadd.f32 %v199, 1.4214138
    %v202 = vmul.f32 %v200, %v192
    %v203 = vmul.f32 %v201, %v193
    %v204 = vadd.f32 %v202, -0.28449672
    %v205 = vadd.f32 %v203, -0.28449672
    %v206 = vmul.f32 %v204, %v192
    %v207 = vmul.f32 %v205, %v193
    %v208 = vadd.f32 %v206, 0.2548296
    %v209 = vadd.f32 %v207, 0.2548296
    %v210 = vmul.f32 %v208, %v192
    %v211 = vmul.f32 %v209, %v193
    %v212 = vmul.f32 %v180, 0.5
    %v213 = vmul.f32 %v181, 0.5
    %v214 = vmul.f32 %v212, %v210
    %v215 = vmul.f32 %v213, %v211
    %v216 = vmul.f32 %v172, -0.5
    %v217 = vmul.f32 %v177, -0.5
    %v218 = vmul.f32 %v216, %v172
    %v219 = vmul.f32 %v217, %v177
    %v220 = vmul.f32 %v218, 1.442695
    %v221 = vpow.pop %v220
    %v222 = vmul.f32 %v219, 1.442695
    %v223 = vpow.pop %v222
    %v224 = vmul.f32 %v214, %v221
    %v225 = vmul.f32 %v215, %v223
    %v226 = vmax.f32 %v172, 0.0
    %v227 = vmax.f32 %v177, 0.0
    %v228 = vsub.f32 %v226, %v224
    %v229 = vsub.f32 %v227, %v225
    %v230 = vld [vmem:[#allocation8] sm:$0xff]
    %v231 = vld [vmem:[#allocation8 + $0x8] sm:$0xff]
    %v232 = vld [vmem:[#allocation8 + $0x10] sm:$0xff]
    %v233 = vld [vmem:[#allocation8 + $0x18] sm:$0xff]
    %v234 = vld [vmem:[#allocation8 + $0x20] sm:$0xff]
    %v235 = vld [vmem:[#allocation8 + $0x28] sm:$0xff]
    %v236 = vld [vmem:[#allocation8 + $0x30] sm:$0xff]
    %v237 = vld [vmem:[#allocation8 + $0x38] sm:$0xff]
    %v238 = vld [vmem:[#allocation10] sm:$0x1]
    %v240 = vlaneseq
    %v241 = vshrl.u32 %v240, 7
    %v242 = vsub.s32 0, %v241
    %v243 = vrot.slane %v238, %v242
    %vm245 = vcmask 523264
    %v247 = vsel %vm245, %v228, 0
    %v250 = vsel %vm245, %v229, 0
    %252 = vmatprep.subr.mxu0 0.0
    %253 = vmatpush1.msra.mxu0 %v230
    %254 = vmatprep.subr.mxu0 0.0
    %255 = vmatpush1.msra.mxu0 %v231
    %256 = vmatprep.subr.mxu0 0.0
    %257 = vmatpush1.msra.mxu0 %v232
    %258 = vmatprep.subr.mxu0 0.0
    %259 = vmatpush1.msra.mxu0 %v233
    %260 = vmatprep.subr.mxu0 0.0
    %261 = vmatpush1.msra.mxu0 %v234
    %262 = vmatprep.subr.mxu0 0.0
    %263 = vmatpush1.msra.mxu0 %v235
    %264 = vmatprep.subr.mxu0 0.0
    %265 = vmatpush1.msra.mxu0 %v236
    %266 = vmatprep.subr.mxu0 0.0
    %267 = vmatpush1.msra.mxu0 %v237
    %268 = vmatprep.subr.mxu0 0.0
    %269 = vmatpush1.msra.mxu0 0.0
    %270 = vmatprep.subr.mxu0 0.0
    %271 = vmatpush1.msra.mxu0 0.0
    %272 = vmatprep.subr.mxu0 0.0
    %273 = vmatpush1.msra.mxu0 0.0
    %274 = vmatprep.subr.mxu0 0.0
    %275 = vmatpush1.msra.mxu0 0.0
    %276 = vmatprep.subr.mxu0 0.0
    %277 = vmatpush1.msra.mxu0 0.0
    %278 = vmatprep.subr.mxu0 0.0
    %279 = vmatpush1.msra.mxu0 0.0
    %280 = vmatprep.subr.mxu0 0.0
    %281 = vmatpush1.msra.mxu0 0.0
    %282 = vmatprep.subr.mxu0 0.0
    %283 = vmatpush1.msra.mxu0 0.0
    %284 = vmatprep.subr.mxu0 0.0
    %285 = vmatpush1.msra.mxu0 0.0
    %286 = vmatprep.subr.mxu0 0.0
    %287 = vmatpush1.msra.mxu0 0.0
    %288 = vmatprep.subr.mxu0 0.0
    %289 = vmatpush1.msra.mxu0 0.0
    %290 = vmatprep.subr.mxu0 0.0
    %291 = vmatpush1.msra.mxu0 0.0
    %292 = vmatprep.subr.mxu0 0.0
    %293 = vmatpush1.msra.mxu0 0.0
    %294 = vmatprep.subr.mxu0 0.0
    %295 = vmatpush1.msra.mxu0 0.0
    %296 = vmatprep.subr.mxu0 0.0
    %297 = vmatpush1.msra.mxu0 0.0
    %298 = vmatprep.subr.mxu0 0.0
    %299 = vmatpush1.msra.mxu0 0.0
    %300 = vmatprep.subr.mxu0 0.0
    %301 = vmatpush1.msra.mxu0 0.0
    %302 = vmatprep.subr.mxu0 0.0
    %303 = vmatpush1.msra.mxu0 0.0
    %304 = vmatprep.subr.mxu0 0.0
    %305 = vmatpush1.msra.mxu0 0.0
    %306 = vmatprep.subr.mxu0 0.0
    %307 = vmatpush1.msra.mxu0 0.0
    %308 = vmatprep.subr.mxu0 0.0
    %309 = vmatpush1.msra.mxu0 0.0
    %310 = vmatprep.subr.mxu0 0.0
    %311 = vmatpush1.msra.mxu0 0.0
    %312 = vmatprep.subr.mxu0 0.0
    %313 = vmatpush1.msra.mxu0 0.0
    %314 = vmatprep.subr.mxu0 0.0
    %315 = vmatpush1.msra.mxu0 0.0
    %316 = vmatprep.mubr.f32.mxu0 0.0
    %317 = vmatmul.mubr.f32.gmra.mrb[0].mxu0 %v247
    %v318 = vpop.f32.mrb[0].mxu0
    %v319 = vadd.f32 %v243, %v318
    %v320 = vpop.f32.mrb[0].mxu0
    %321 = vmatprep.mubr.f32.mxu0 0.0
    %322 = vmatmul.mubr.f32.gmra.mrb[0].mxu0 %v250
    %v323 = vpop.f32.mrb[0].mxu0
    %v324 = vadd.f32 %v243, %v323
    %v325 = vpop.f32.mrb[0].mxu0
    %326 = vdwg.mxu0
    %327 = vst [vmem:[#allocation11] sm:$0xff] %v319
    %328 = vst [vmem:[#allocation11 + $0x8] sm:$0xff] %v324
    // Predicated region
    $region42: #{tpu_custom_call.1} parent=1 // pred_check
      _
    $region43: #{tpu_custom_call.1} parent=1 // pred_check_branch
      %330 = sbr.rel (0) target = $region45
    $region44: #{tpu_custom_call.1} parent=1 // pred_region
      %s332 = ssub.s32 256, 256
      %333 = vsyncadd [#allocation4], %s332
      %s334 = sshll.u32 [#allocation11], 4
      %s335 = int_to_ptr.vmem [resolvable:$true] %s334
      %340 = dma.vmem_to_hbm [thread:$0]  %s335, 256, %s5, [#allocation4], 128, 128, 8
    $region45: #{tpu_custom_call.1} parent=1 // pred_fallthru
      _
    // Predicated region
    $region46: #{tpu_custom_call.1} parent=1 // pred_check
      _
    $region47: #{tpu_custom_call.1} parent=1 // pred_check_branch
      %342 = sbr.rel (0) target = $region49
    $region48: #{tpu_custom_call.1} parent=1 // pred_region
      %343 = dma.done [#allocation4], 256
    $region49: #{tpu_custom_call.1} parent=1 // pred_fallthru
      _
    %344 = vsyncpa [#allocation3], 1
    %345 = vsyncpa [#allocation6], 1
    %346 = vsyncpa [#allocation9], 1
    %347 = vsyncpa [#allocation4], 1

</llo_original>
